<compile_context>
chip_gen: v7x
topology: tpu7x:2x2x1
jax: 0.10.0
libtpu: 0.0.40
codegen_flags: <defaults>
</compile_context>

<pallas_src>
import jax
import jax.numpy as jnp
from jax import lax
from jax.experimental import pallas as pl
from jax.experimental.pallas import tpu as pltpu

# Deterministic stand-ins for ENV_CONFIG = CALCULATE_CONFIG()
HUMAN_EXHALATION_FLOW = 3e-4
TIME_STEP = 1.0


def _pinn_kernel(flow_t_ref, w_ref, node_ref, edges_row_ref, edges_col_ref, out_ref):
    """Lane-dense single-shot kernel.

    flow_t_ref : (k*C+1, H) f32  flow flattened over (kw, C), transposed, + ones row (for bias)
    w_ref      : (k, k*C+1) f32  conv-weight row per vertical shift, + bias column (row 0 only)
    node_ref   : (3, N)     f32  rows = [concentration, people, size]
    edges_row  : (1, 2E)    i32  [src..., dst...]  along lanes
    edges_col  : (2E, 1)    i32  same values       along sublanes
    out_ref    : (2, L)     f32  row 0 = result (lane-padded), row 1 = per-edge flow (lane-padded)
    """
    k = w_ref.shape[0]
    n = node_ref.shape[1]
    e2 = edges_row_ref.shape[1]
    e = e2 // 2
    L = out_ref.shape[1]

    # ---- conv: ONE MXU matmul (k, kC+1) @ (kC+1, H), then k static banded row sums -> (1, E)
    conv_full = jnp.dot(w_ref[...], flow_t_ref[...],
                        preferred_element_type=jnp.float32)          # (k, H)
    flow_row = jnp.zeros((1, e), jnp.float32)
    for di in range(k):                                              # static unroll, k is tiny
        flow_row = flow_row + conv_full[di:di + 1, di:di + e]

    # ---- one-hot matrices (iota + compare, pure VPU, built directly in both orientations) ----
    edges_r = edges_row_ref[...]                                     # (1, 2E)
    edges_c = edges_col_ref[...]                                     # (2E, 1)
    oh_gather = (lax.broadcasted_iota(jnp.int32, (n, e2), 0) == edges_r
                 ).astype(jnp.float32)                               # (N, 2E)
    oh_scatter = (lax.broadcasted_iota(jnp.int32, (e2, n), 1) == edges_c
                  ).astype(jnp.float32)                              # (2E, N)

    conc = node_ref[0:1, :]                                          # (1, N)
    people = node_ref[1:2, :]
    sizes = node_ref[2:3, :]
    inv_sizes = 1.0 / sizes                                          # (1, N) one recip per node
    # (if a size is 0 this yields inf, matching the PyTorch division-by-zero behaviour)

    # ---- fused gather: conc & 1/size at [src | dst] in ONE matmul -> (2, 2E) ----
    cs = jnp.concatenate([conc, inv_sizes], axis=0)                  # (2, N)
    gathered = jnp.dot(cs, oh_gather, preferred_element_type=jnp.float32)
    conc_src = gathered[0:1, :e]                                     # (1, E)
    inv_src = gathered[1:2, :e]                                      # (1, E)
    inv_dst = gathered[1:2, e:]                                      # (1, E)

    src = edges_r[:, :e]
    dst = edges_r[:, e:]
    valid = (src != dst).astype(jnp.float32)                         # self-loops contribute 0
    # (out-of-range indices gather 0 from the one-hot and scatter to nothing -> naturally safe)

    base = flow_row * conc_src * jnp.float32(TIME_STEP) * valid      # (1, E)
    contrib = jnp.concatenate([-base * inv_src, base * inv_dst], axis=1)   # (1, 2E)

    # ---- fused scatter-add into nodes: ONE matmul, lane-dense (1, N) ----
    node_delta = jnp.dot(contrib, oh_scatter, preferred_element_type=jnp.float32)

    people_exhaled = jnp.float32(HUMAN_EXHALATION_FLOW) * people * inv_sizes
    mask = (lax.broadcasted_iota(jnp.int32, (1, n), 1) != (n - 1)).astype(jnp.float32)
    result_row = conc + (node_delta + people_exhaled * jnp.float32(TIME_STEP)) * mask  # (1, N)

    # ---- single dense output slab: row 0 = result, row 1 = flow (lane-padded to L) ----
    def pad_row(row, width):
        if L == width:
            return row
        return jnp.concatenate([row, jnp.zeros((1, L - width), jnp.float32)], axis=1)

    out_ref[...] = jnp.concatenate([pad_row(result_row, n), pad_row(flow_row, e)], axis=0)


def pinn_layer_forward(origin_data, flow_hwc, edge_index, conv_weight, conv_bias):
    """origin_data: (N, T, F>=3) f32   flow_hwc: (H, W, C_in) with W == kernel size
       edge_index: (2, E) int32        conv_weight: (1, C_in, k, k)   conv_bias: (1,)"""
    N = origin_data.shape[0]
    k = conv_weight.shape[-1]
    H, W, C = flow_hwc.shape
    E = H - k + 1
    assert W == k and edge_index.shape[1] == E

    # Packed, lane-dense operands (5 VMEM buffers; bias folded into weight via a ones-row).
    flow2d = flow_hwc.astype(jnp.float32).reshape(H, k * C)                      # [i, j*C + c]
    flow_t = jnp.concatenate([flow2d.T, jnp.ones((1, H), jnp.float32)], axis=0)  # (kC+1, H)
    w2d = jnp.transpose(conv_weight[0].astype(jnp.float32), (1, 2, 0)).reshape(k, k * C)
    bias_col = jnp.zeros((k, 1), jnp.float32).at[0, 0].set(conv_bias.astype(jnp.float32)[0])
    w_aug = jnp.concatenate([w2d, bias_col], axis=1)                             # (k, kC+1)

    node_data = jnp.transpose(origin_data[:, -1, :3].astype(jnp.float32))        # (3, N)

    edges_flat = jnp.concatenate([edge_index[0], edge_index[1]]).astype(jnp.int32)  # (2E,)
    edges_row = edges_flat.reshape(1, 2 * E)
    edges_col = edges_flat.reshape(2 * E, 1)

    L = max(((max(N, E) + 127) // 128) * 128, 128)

    flops = 2 * k * (k * C + 1) * H + 2 * 2 * N * 2 * E + 2 * 2 * E * N + 12 * E + 10 * N
    bytes_accessed = 4 * (flow_t.size + w_aug.size + node_data.size
                          + 2 * edges_flat.size + 2 * L)

    vmem = pl.BlockSpec(memory_space=pltpu.MemorySpace.VMEM)
    out = pl.pallas_call(
        _pinn_kernel,
        out_shape=jax.ShapeDtypeStruct((2, L), jnp.float32),
        in_specs=[vmem, vmem, vmem, vmem, vmem],
        out_specs=vmem,
        cost_estimate=pl.CostEstimate(flops=int(flops), transcendentals=int(N),
                                      bytes_accessed=int(bytes_accessed)),
    )(flow_t, w_aug, node_data, edges_row, edges_col)

    result = out[0, :N].reshape(N, 1)
    flow_vals = out[1, :E].reshape(E, 1)
    # second output: [src, dst, flow_value] per edge (indices cast to f32 to concatenate)
    edges_out = jnp.concatenate([edge_index.T.astype(jnp.float32), flow_vals], axis=1)  # (E, 3)
    return result, edges_out


if __name__ == "__main__":
    key = jax.random.PRNGKey(0)
    k1, k2, k3, k4 = jax.random.split(key, 4)

    N, E, C_in, ksize, T = 8, 8, 4, 3, 5
    H, W = E + ksize - 1, ksize

    origin_data = jax.random.normal(k1, (N, T, 3), jnp.float32)
    # size channel is a divisor -> keep strictly positive
    origin_data = origin_data.at[:, :, 2].set(jnp.abs(origin_data[:, :, 2]) + 0.5)

    flow_hwc = jax.random.normal(k2, (H, W, C_in), jnp.float32)

    # edge_index covers all 8 node ids (so unique() has N entries); includes self-loops
    edge_index = jnp.array([[0, 1, 2, 3, 4, 5, 6, 7],
                            [1, 2, 3, 0, 5, 4, 6, 7]], dtype=jnp.int32)

    conv_weight = 0.1 * jax.random.normal(k3, (1, C_in, ksize, ksize), jnp.float32)
    conv_bias = 0.1 * jax.random.normal(k4, (1,), jnp.float32)

    result, edges_out = pinn_layer_forward(origin_data, flow_hwc, edge_index,
                                           conv_weight, conv_bias)
    jax.block_until_ready((result, edges_out))
    assert result.shape == (N, 1) and edges_out.shape == (E, 3)

    # pure-JAX reference check (host-side only, not the hot path)
    patches = jnp.stack([flow_hwc[i:i + ksize, :ksize, :] for i in range(E)], axis=0)
    flow_ref = jnp.einsum("eijc,cij->e", patches, conv_weight[0],
                          precision=lax.Precision.HIGHEST) + conv_bias[0]
    conc = origin_data[:, -1, 0]
    people = origin_data[:, -1, 1]
    size = origin_data[:, -1, 2]
    src, dst = edge_index[0], edge_index[1]
    base = jnp.where(src != dst, flow_ref * conc[src] * TIME_STEP, 0.0)
    delta = jnp.zeros(N).at[src].add(-base / size[src]).at[dst].add(base / size[dst])
    mask = jnp.ones(N).at[-1].set(0.0)
    ref_result = conc + (delta + HUMAN_EXHALATION_FLOW * people / size * TIME_STEP) * mask
    assert jnp.allclose(result[:, 0], ref_result, rtol=2e-3, atol=1e-4), "result mismatch"
    assert jnp.allclose(edges_out[:, 2], flow_ref, rtol=2e-3, atol=1e-4), "flow mismatch"

    print("KERNEL_OK")
</pallas_src>

<mosaic_0001>
module attributes {stable_mosaic.version = 11 : i64} {
  func.func @_pinn_kernel(%arg0: memref<13x10xf32, #tpu.memory_space<vmem>>, %arg1: memref<3x13xf32, #tpu.memory_space<vmem>>, %arg2: memref<3x8xf32, #tpu.memory_space<vmem>>, %arg3: memref<1x16xi32, #tpu.memory_space<vmem>>, %arg4: memref<16x1xi32, #tpu.memory_space<vmem>>, %arg5: memref<2x128xf32, #tpu.memory_space<vmem>>) attributes {dimension_semantics = [], scalar_prefetch = 0 : i64, scratch_operands = 0 : i64, tpu.core_type = #tpu.core_type<tc>} {
    %c0 = arith.constant 0 : index
    %c0_0 = arith.constant 0 : index
    %0 = vector.load %arg1[%c0, %c0_0] : memref<3x13xf32, #tpu.memory_space<vmem>>, vector<3x13xf32>
    %c0_1 = arith.constant 0 : index
    %c0_2 = arith.constant 0 : index
    %1 = vector.load %arg0[%c0_1, %c0_2] : memref<13x10xf32, #tpu.memory_space<vmem>>, vector<13x10xf32>
    %cst = arith.constant dense<0.000000e+00> : vector<3x10xf32>
    %2 = tpu.matmul %0, %1, %cst {dimension_numbers = #tpu.dot_dimension_numbers<[1], [0], [0], [1], [0, 0, 1, 1], [], []>} : vector<3x13xf32>, vector<13x10xf32>, vector<3x10xf32> -> vector<3x10xf32>
    %cst_3 = arith.constant 0.000000e+00 : f32
    %3 = vector.broadcast %cst_3 : f32 to vector<1x8xf32>
    %4 = vector.extract_strided_slice %2 {offsets = [0, 0], sizes = [1, 8], strides = [1, 1]} : vector<3x10xf32> to vector<1x8xf32>
    %5 = arith.addf %3, %4 : vector<1x8xf32>
    %6 = vector.extract_strided_slice %2 {offsets = [1, 1], sizes = [1, 8], strides = [1, 1]} : vector<3x10xf32> to vector<1x8xf32>
    %7 = arith.addf %5, %6 : vector<1x8xf32>
    %8 = vector.extract_strided_slice %2 {offsets = [2, 2], sizes = [1, 8], strides = [1, 1]} : vector<3x10xf32> to vector<1x8xf32>
    %9 = arith.addf %7, %8 : vector<1x8xf32>
    %c0_4 = arith.constant 0 : index
    %c0_5 = arith.constant 0 : index
    %10 = vector.load %arg3[%c0_4, %c0_5] : memref<1x16xi32, #tpu.memory_space<vmem>>, vector<1x16xi32>
    %c0_6 = arith.constant 0 : index
    %c0_7 = arith.constant 0 : index
    %11 = vector.load %arg4[%c0_6, %c0_7] : memref<16x1xi32, #tpu.memory_space<vmem>>, vector<16x1xi32>
    %12 = tpu.iota {dimensions = array<i32: 0>} : vector<8x16xi32>
    %13 = vector.broadcast %10 : vector<1x16xi32> to vector<8x16xi32>
    %14 = arith.cmpi eq, %12, %13 : vector<8x16xi32>
    %15 = arith.extui %14 : vector<8x16xi1> to vector<8x16xi32>
    %16 = arith.sitofp %15 : vector<8x16xi32> to vector<8x16xf32>
    %17 = tpu.iota {dimensions = array<i32: 1>} : vector<16x8xi32>
    %18 = vector.broadcast %11 : vector<16x1xi32> to vector<16x8xi32>
    %19 = arith.cmpi eq, %17, %18 : vector<16x8xi32>
    %20 = arith.extui %19 : vector<16x8xi1> to vector<16x8xi32>
    %21 = arith.sitofp %20 : vector<16x8xi32> to vector<16x8xf32>
    %c0_8 = arith.constant 0 : index
    %c0_9 = arith.constant 0 : index
    %22 = vector.load %arg2[%c0_8, %c0_9] : memref<3x8xf32, #tpu.memory_space<vmem>>, vector<1x8xf32>
    %c1 = arith.constant 1 : index
    %c0_10 = arith.constant 0 : index
    %23 = vector.load %arg2[%c1, %c0_10] : memref<3x8xf32, #tpu.memory_space<vmem>>, vector<1x8xf32>
    %c2 = arith.constant 2 : index
    %c0_11 = arith.constant 0 : index
    %24 = vector.load %arg2[%c2, %c0_11] : memref<3x8xf32, #tpu.memory_space<vmem>>, vector<1x8xf32>
    %cst_12 = arith.constant 1.000000e+00 : f32
    %25 = vector.broadcast %cst_12 : f32 to vector<1x8xf32>
    %26 = arith.divf %25, %24 : vector<1x8xf32>
    %27 = tpu.concatenate %22, %26 in 0 : vector<1x8xf32>, vector<1x8xf32> -> vector<2x8xf32>
    %cst_13 = arith.constant dense<0.000000e+00> : vector<2x16xf32>
    %28 = tpu.matmul %27, %16, %cst_13 {dimension_numbers = #tpu.dot_dimension_numbers<[1], [0], [0], [1], [0, 0, 1, 1], [], []>} : vector<2x8xf32>, vector<8x16xf32>, vector<2x16xf32> -> vector<2x16xf32>
    %29 = vector.extract_strided_slice %28 {offsets = [0, 0], sizes = [1, 8], strides = [1, 1]} : vector<2x16xf32> to vector<1x8xf32>
    %30 = vector.extract_strided_slice %28 {offsets = [1, 0], sizes = [1, 8], strides = [1, 1]} : vector<2x16xf32> to vector<1x8xf32>
    %31 = vector.extract_strided_slice %28 {offsets = [1, 8], sizes = [1, 8], strides = [1, 1]} : vector<2x16xf32> to vector<1x8xf32>
    %32 = vector.extract_strided_slice %10 {offsets = [0, 0], sizes = [1, 8], strides = [1, 1]} : vector<1x16xi32> to vector<1x8xi32>
    %33 = vector.extract_strided_slice %10 {offsets = [0, 8], sizes = [1, 8], strides = [1, 1]} : vector<1x16xi32> to vector<1x8xi32>
    %34 = arith.cmpi ne, %32, %33 : vector<1x8xi32>
    %35 = arith.extui %34 : vector<1x8xi1> to vector<1x8xi32>
    %36 = arith.sitofp %35 : vector<1x8xi32> to vector<1x8xf32>
    %37 = arith.mulf %9, %29 : vector<1x8xf32>
    %cst_14 = arith.constant 1.000000e+00 : f32
    %38 = vector.broadcast %cst_14 : f32 to vector<1x8xf32>
    %39 = arith.mulf %37, %38 : vector<1x8xf32>
    %40 = arith.mulf %39, %36 : vector<1x8xf32>
    %cst_15 = arith.constant 0.000000e+00 : f32
    %41 = vector.broadcast %cst_15 : f32 to vector<1x8xf32>
    %42 = arith.subf %41, %40 : vector<1x8xf32>
    %43 = arith.mulf %42, %30 : vector<1x8xf32>
    %44 = arith.mulf %40, %31 : vector<1x8xf32>
    %45 = tpu.concatenate %43, %44 in 1 : vector<1x8xf32>, vector<1x8xf32> -> vector<1x16xf32>
    %cst_16 = arith.constant dense<0.000000e+00> : vector<1x8xf32>
    %46 = tpu.matmul %45, %21, %cst_16 {dimension_numbers = #tpu.dot_dimension_numbers<[1], [0], [0], [1], [0, 0, 1, 1], [], []>} : vector<1x16xf32>, vector<16x8xf32>, vector<1x8xf32> -> vector<1x8xf32>
    %cst_17 = arith.constant 3.000000e-04 : f32
    %47 = vector.broadcast %cst_17 : f32 to vector<1x8xf32>
    %48 = arith.mulf %47, %23 : vector<1x8xf32>
    %49 = arith.mulf %48, %26 : vector<1x8xf32>
    %50 = tpu.iota {dimensions = array<i32: 1>} : vector<1x8xi32>
    %c7_i32 = arith.constant 7 : i32
    %51 = vector.broadcast %c7_i32 : i32 to vector<1x8xi32>
    %52 = arith.cmpi ne, %50, %51 : vector<1x8xi32>
    %53 = arith.extui %52 : vector<1x8xi1> to vector<1x8xi32>
    %54 = arith.sitofp %53 : vector<1x8xi32> to vector<1x8xf32>
    %cst_18 = arith.constant 1.000000e+00 : f32
    %55 = vector.broadcast %cst_18 : f32 to vector<1x8xf32>
    %56 = arith.mulf %49, %55 : vector<1x8xf32>
    %57 = arith.addf %46, %56 : vector<1x8xf32>
    %58 = arith.mulf %57, %54 : vector<1x8xf32>
    %59 = arith.addf %22, %58 : vector<1x8xf32>
    %cst_19 = arith.constant 0.000000e+00 : f32
    %60 = vector.broadcast %cst_19 : f32 to vector<1x120xf32>
    %61 = tpu.concatenate %59, %60 in 1 : vector<1x8xf32>, vector<1x120xf32> -> vector<1x128xf32>
    %cst_20 = arith.constant 0.000000e+00 : f32
    %62 = vector.broadcast %cst_20 : f32 to vector<1x120xf32>
    %63 = tpu.concatenate %9, %62 in 1 : vector<1x8xf32>, vector<1x120xf32> -> vector<1x128xf32>
    %64 = tpu.concatenate %61, %63 in 0 : vector<1x128xf32>, vector<1x128xf32> -> vector<2x128xf32>
    %c0_21 = arith.constant 0 : index
    %c0_22 = arith.constant 0 : index
    %65 = vector.load %arg5[%c0_21, %c0_22] : memref<2x128xf32, #tpu.memory_space<vmem>>, vector<2x128xf32>
    tpu.vector_store %arg5[%c0_21, %c0_22], %64 {strides = array<i32>} : memref<2x128xf32, #tpu.memory_space<vmem>>, vector<2x128xf32>,
    return
  }
}

</mosaic_0001>

<llo_original>
// kernel: tpu_custom_call.1
$region0: #{tpu_custom_call.1}
  #allocation0 [shape = 'u32[]', space=smem, size = 0x4, offset = 0x4, fixed_abs, tag = 'smem constant byte address 0x4 - core index']
  #allocation1 [shape = 'u32[144,128]{1,0:T(1,128)}', space=vmem, size = 0x12000, scoped, tag = 'internal scratch']
  %s0 = inlined_call_operand.vmem [shape: f32[13,10], index: 0, kind: input, shape index: {}]
  %s1 = inlined_call_operand.vmem [shape: f32[3,13], index: 1, kind: input, shape index: {}]
  %s2 = inlined_call_operand.vmem [shape: f32[3,8], index: 2, kind: input, shape index: {}]
  %s3 = inlined_call_operand.vmem [shape: s32[1,16], index: 3, kind: input, shape index: {}]
  %s4 = inlined_call_operand.vmem [shape: s32[16,1], index: 4, kind: input, shape index: {}]
  %s5 = inlined_call_operand.hbm [shape: f32[2,128], index: 5, kind: output, shape index: {}]
  %s6 = sld [smem:[#allocation0]]
  $region30: #{tpu_custom_call.1} parent=0
    _
  %s8 = ssub.s32 1, %s6
  %s9 = scalar_select 0, %s8, %s6
  $region1: #{tpu_custom_call.1} parent=0
    #allocation2 [shape = 'u8[1024]{0}', space=vmem, size = 0x400, scoped, tag = 'output window, operand 0, single buffered']
    #allocation3 [shape = 's32[1]{0}', space=sflag, size = 0x4, scoped, tag = 'scoped memory for tpu_custom_call.1']
    %10 = vsyncpa [#allocation3], 0
    // Predicated region
    $region2: #{tpu_custom_call.1} parent=1 // pred_check
      _
    $region3: #{tpu_custom_call.1} parent=1 // pred_check_branch
      %12 = sbr.rel (0) target = $region5
    $region4: #{tpu_custom_call.1} parent=1 // pred_region
      _
    $region5: #{tpu_custom_call.1} parent=1 // pred_fallthru
      _
    // Predicated region
    $region6: #{tpu_custom_call.1} parent=1 // pred_check
      _
    $region7: #{tpu_custom_call.1} parent=1 // pred_check_branch
      %14 = sbr.rel (0) target = $region9
    $region8: #{tpu_custom_call.1} parent=1 // pred_region
      _
    $region9: #{tpu_custom_call.1} parent=1 // pred_fallthru
      _
    // Predicated region
    $region10: #{tpu_custom_call.1} parent=1 // pred_check
      _
    $region11: #{tpu_custom_call.1} parent=1 // pred_check_branch
      %16 = sbr.rel (0) target = $region13
    $region12: #{tpu_custom_call.1} parent=1 // pred_region
      _
    $region13: #{tpu_custom_call.1} parent=1 // pred_fallthru
      _
    // Predicated region
    $region14: #{tpu_custom_call.1} parent=1 // pred_check
      _
    $region15: #{tpu_custom_call.1} parent=1 // pred_check_branch
      %18 = sbr.rel (0) target = $region17
    $region16: #{tpu_custom_call.1} parent=1 // pred_region
      _
    $region17: #{tpu_custom_call.1} parent=1 // pred_fallthru
      _
    // Predicated region
    $region18: #{tpu_custom_call.1} parent=1 // pred_check
      _
    $region19: #{tpu_custom_call.1} parent=1 // pred_check_branch
      %20 = sbr.rel (0) target = $region21
    $region20: #{tpu_custom_call.1} parent=1 // pred_region
      _
    $region21: #{tpu_custom_call.1} parent=1 // pred_fallthru
      _
    %v21 = vld [vmem:[%s1] sm:$0x7]
    %v22 = vld [vmem:[%s0] sm:$0xff]
    %v23 = vld [vmem:[%s0 + $0x8] sm:$0x1f]
    %vm24 = vcmask 105472
    %v26 = vsel %vm24, %v21, 0
    %vm28 = vcmask 1044480
    %v30 = vsel %vm28, %v23, 0
    %32 = vmatprep.subr.mxu0 0.0
    %33 = vmatpush1.msra.mxu0 %v22
    %34 = vmatprep.subr.mxu0 0.0
    %35 = vmatpush1.msra.mxu0 %v30
    %36 = vmatprep.subr.mxu0 0.0
    %37 = vmatpush1.msra.mxu0 0.0
    %38 = vmatprep.subr.mxu0 0.0
    %39 = vmatpush1.msra.mxu0 0.0
    %40 = vmatprep.subr.mxu0 0.0
    %41 = vmatpush1.msra.mxu0 0.0
    %42 = vmatprep.subr.mxu0 0.0
    %43 = vmatpush1.msra.mxu0 0.0
    %44 = vmatprep.subr.mxu0 0.0
    %45 = vmatpush1.msra.mxu0 0.0
    %46 = vmatprep.subr.mxu0 0.0
    %47 = vmatpush1.msra.mxu0 0.0
    %48 = vmatprep.subr.mxu0 0.0
    %49 = vmatpush1.msra.mxu0 0.0
    %50 = vmatprep.subr.mxu0 0.0
    %51 = vmatpush1.msra.mxu0 0.0
    %52 = vmatprep.subr.mxu0 0.0
    %53 = vmatpush1.msra.mxu0 0.0
    %54 = vmatprep.subr.mxu0 0.0
    %55 = vmatpush1.msra.mxu0 0.0
    %56 = vmatprep.subr.mxu0 0.0
    %57 = vmatpush1.msra.mxu0 0.0
    %58 = vmatprep.subr.mxu0 0.0
    %59 = vmatpush1.msra.mxu0 0.0
    %60 = vmatprep.subr.mxu0 0.0
    %61 = vmatpush1.msra.mxu0 0.0
    %62 = vmatprep.subr.mxu0 0.0
    %63 = vmatpush1.msra.mxu0 0.0
    %64 = vmatprep.subr.mxu0 0.0
    %65 = vmatpush1.msra.mxu0 0.0
    %66 = vmatprep.subr.mxu0 0.0
    %67 = vmatpush1.msra.mxu0 0.0
    %68 = vmatprep.subr.mxu0 0.0
    %69 = vmatpush1.msra.mxu0 0.0
    %70 = vmatprep.subr.mxu0 0.0
    %71 = vmatpush1.msra.mxu0 0.0
    %72 = vmatprep.subr.mxu0 0.0
    %73 = vmatpush1.msra.mxu0 0.0
    %74 = vmatprep.subr.mxu0 0.0
    %75 = vmatpush1.msra.mxu0 0.0
    %76 = vmatprep.subr.mxu0 0.0
    %77 = vmatpush1.msra.mxu0 0.0
    %78 = vmatprep.subr.mxu0 0.0
    %79 = vmatpush1.msra.mxu0 0.0
    %80 = vmatprep.subr.mxu0 0.0
    %81 = vmatpush1.msra.mxu0 0.0
    %82 = vmatprep.subr.mxu0 0.0
    %83 = vmatpush1.msra.mxu0 0.0
    %84 = vmatprep.subr.mxu0 0.0
    %85 = vmatpush1.msra.mxu0 0.0
    %86 = vmatprep.subr.mxu0 0.0
    %87 = vmatpush1.msra.mxu0 0.0
    %88 = vmatprep.subr.mxu0 0.0
    %89 = vmatpush1.msra.mxu0 0.0
    %90 = vmatprep.subr.mxu0 0.0
    %91 = vmatpush1.msra.mxu0 0.0
    %92 = vmatprep.subr.mxu0 0.0
    %93 = vmatpush1.msra.mxu0 0.0
    %94 = vmatprep.subr.mxu0 0.0
    %95 = vmatpush1.msra.mxu0 0.0
    %96 = vmatprep.mubr.f32.mxu0 0.0
    %97 = vmatmul.mubr.f32.gmra.mrb[0].mxu0 %v26
    %v98 = vpop.f32.mrb[0].mxu0
    %v99 = vadd.f32 0.0, %v98
    %v100 = vpop.f32.mrb[0].mxu0
    %101 = vdwg.mxu0
    %v102 = vadd.f32 %v99, 0.0
    %v104 = vrot.slane %v99, 1
    %105 = vrot.lane.b32.xlu0 %v104, 127
    %v106 = vpop.permute.xlu0 %105
    %v108 = vadd.f32 %v102, %v106
    %v109 = vrot.slane %v99, 2
    %110 = vrot.lane.b32.xlu0 %v109, 126
    %v111 = vpop.permute.xlu0 %110
    %v113 = vadd.f32 %v108, %v111
    %v114 = vld [vmem:[%s3] sm:$0x1]
    %v115 = vld [vmem:[%s4] sm:$0xff]
    %v116 = vld [vmem:[%s4 + $0x8] sm:$0xff]
    %v117 = vlaneseq
    %v118 = vshrl.u32 %v117, 7
    %v119 = vlaneseq
    %v120 = vshrl.u32 %v119, 7
    %v121 = vsub.s32 0, %v120
    %v122 = vrot.slane %v114, %v121
    %vm123 = vcmp.eq.s32.totalorder %v118, %v122
    %v124 = vsel %vm123, 1, 0
    %v125 = vcvt.s32.f32 %v124
    %v126 = vlaneseq
    %v127 = vand.u32 %v126, 127
    %128 = vset.pattern.permute.xlu0 0
    %129 = vperm.xlu0 %128, %v115
    %v130 = vpop.permute.xlu0 %129
    %131 = vset.pattern.permute.xlu0 0
    %132 = vperm.xlu0 %131, %v116
    %v133 = vpop.permute.xlu0 %132
    %vm134 = vcmp.eq.s32.totalorder %v127, %v130
    %vm135 = vcmp.eq.s32.totalorder %v127, %v133
    %v136 = vsel %vm134, 1, 0
    %v137 = vsel %vm135, 1, 0
    %v138 = vcvt.s32.f32 %v136
    %v139 = vcvt.s32.f32 %v137
    %v140 = vld [vmem:[%s2] sm:$0x1]
    %v141 = vld [vmem:[%s2 + $0x1] sm:$0x1]
    %v142 = vld [vmem:[%s2 + $0x2] sm:$0x1]
    %v143 = vrcp.pop %v142
    %v144 = vmul.f32 1.0, %v143
    %v146 = vrot.slane %v144, 7
    %vm148 = vcmask 1040384
    %v149 = vsel %vm148, %v140, %v146
    %vm150 = vcmask 64512
    %v152 = vsel %vm150, %v149, 0
    %154 = vmatprep.subr.mxu0 0.0
    %155 = vmatpush1.msra.mxu0 %v125
    %156 = vmatprep.subr.mxu0 0.0
    %157 = vmatpush1.msra.mxu0 0.0
    %158 = vmatprep.subr.mxu0 0.0
    %159 = vmatpush1.msra.mxu0 0.0
    %160 = vmatprep.subr.mxu0 0.0
    %161 = vmatpush1.msra.mxu0 0.0
    %162 = vmatprep.subr.mxu0 0.0
    %163 = vmatpush1.msra.mxu0 0.0
    %164 = vmatprep.subr.mxu0 0.0
    %165 = vmatpush1.msra.mxu0 0.0
    %166 = vmatprep.subr.mxu0 0.0
    %167 = vmatpush1.msra.mxu0 0.0
    %168 = vmatprep.subr.mxu0 0.0
    %169 = vmatpush1.msra.mxu0 0.0
    %170 = vmatprep.subr.mxu0 0.0
    %171 = vmatpush1.msra.mxu0 0.0
    %172 = vmatprep.subr.mxu0 0.0
    %173 = vmatpush1.msra.mxu0 0.0
    %174 = vmatprep.subr.mxu0 0.0
    %175 = vmatpush1.msra.mxu0 0.0
    %176 = vmatprep.subr.mxu0 0.0
    %177 = vmatpush1.msra.mxu0 0.0
    %178 = vmatprep.subr.mxu0 0.0
    %179 = vmatpush1.msra.mxu0 0.0
    %180 = vmatprep.subr.mxu0 0.0
    %181 = vmatpush1.msra.mxu0 0.0
    %182 = vmatprep.subr.mxu0 0.0
    %183 = vmatpush1.msra.mxu0 0.0
    %184 = vmatprep.subr.mxu0 0.0
    %185 = vmatpush1.msra.mxu0 0.0
    %186 = vmatprep.subr.mxu0 0.0
    %187 = vmatpush1.msra.mxu0 0.0
    %188 = vmatprep.subr.mxu0 0.0
    %189 = vmatpush1.msra.mxu0 0.0
    %190 = vmatprep.subr.mxu0 0.0
    %191 = vmatpush1.msra.mxu0 0.0
    %192 = vmatprep.subr.mxu0 0.0
    %193 = vmatpush1.msra.mxu0 0.0
    %194 = vmatprep.subr.mxu0 0.0
    %195 = vmatpush1.msra.mxu0 0.0
    %196 = vmatprep.subr.mxu0 0.0
    %197 = vmatpush1.msra.mxu0 0.0
    %198 = vmatprep.subr.mxu0 0.0
    %199 = vmatpush1.msra.mxu0 0.0
    %200 = vmatprep.subr.mxu0 0.0
    %201 = vmatpush1.msra.mxu0 0.0
    %202 = vmatprep.subr.mxu0 0.0
    %203 = vmatpush1.msra.mxu0 0.0
    %204 = vmatprep.subr.mxu0 0.0
    %205 = vmatpush1.msra.mxu0 0.0
    %206 = vmatprep.subr.mxu0 0.0
    %207 = vmatpush1.msra.mxu0 0.0
    %208 = vmatprep.subr.mxu0 0.0
    %209 = vmatpush1.msra.mxu0 0.0
    %210 = vmatprep.subr.mxu0 0.0
    %211 = vmatpush1.msra.mxu0 0.0
    %212 = vmatprep.subr.mxu0 0.0
    %213 = vmatpush1.msra.mxu0 0.0
    %214 = vmatprep.subr.mxu0 0.0
    %215 = vmatpush1.msra.mxu0 0.0
    %216 = vmatprep.subr.mxu0 0.0
    %217 = vmatpush1.msra.mxu0 0.0
    %218 = vmatprep.mubr.f32.mxu0 0.0
    %219 = vmatmul.mubr.f32.gmra.mrb[0].mxu0 %v152
    %v220 = vpop.f32.mrb[0].mxu0
    %v221 = vadd.f32 0.0, %v220
    %v222 = vpop.f32.mrb[0].mxu0
    %223 = vdwg.mxu0
    %224 = vrot.lane.b32.xlu0 %v114, 120
    %v225 = vpop.permute.xlu0 %224
    %vm226 = vcmp.ne.s32.totalorder %v114, %v225
    %v227 = vsel %vm226, 1, 0
    %v228 = vcvt.s32.f32 %v227
    %v229 = vmul.f32 %v113, %v221
    %v230 = vmul.f32 %v229, %v228
    %v231 = vsub.f32 0.0, %v230
    %v233 = vrot.slane %v221, 1
    %v235 = vmul.f32 %v231, %v233
    %236 = vrot.lane.b32.xlu0 %v233, 120
    %v237 = vpop.permute.xlu0 %236
    %v239 = vmul.f32 %v230, %v237
    %241 = vrot.lane.b32.xlu0 %v239, 8
    %v242 = vpop.permute.xlu0 %241
    %v244 = vsel %vm150, %v235, %v242
    %v245 = vmul.f32 %v141, 0.0003
    %v246 = vmul.f32 %v245, %v144
    %vm247 = vcmp.ne.s32.totalorder %v127, 7
    %v248 = vsel %vm247, 1, 0
    %v249 = vcvt.s32.f32 %v248
    %vm250 = vcmask 130048
    %v252 = vsel %vm250, %v244, 0
    %254 = vmatprep.subr.mxu0 0.0
    %255 = vmatpush1.msra.mxu0 %v138
    %256 = vmatprep.subr.mxu0 0.0
    %257 = vmatpush1.msra.mxu0 %v139
    %258 = vmatprep.subr.mxu0 0.0
    %259 = vmatpush1.msra.mxu0 0.0
    %260 = vmatprep.subr.mxu0 0.0
    %261 = vmatpush1.msra.mxu0 0.0
    %262 = vmatprep.subr.mxu0 0.0
    %263 = vmatpush1.msra.mxu0 0.0
    %264 = vmatprep.subr.mxu0 0.0
    %265 = vmatpush1.msra.mxu0 0.0
    %266 = vmatprep.subr.mxu0 0.0
    %267 = vmatpush1.msra.mxu0 0.0
    %268 = vmatprep.subr.mxu0 0.0
    %269 = vmatpush1.msra.mxu0 0.0
    %270 = vmatprep.subr.mxu0 0.0
    %271 = vmatpush1.msra.mxu0 0.0
    %272 = vmatprep.subr.mxu0 0.0
    %273 = vmatpush1.msra.mxu0 0.0
    %274 = vmatprep.subr.mxu0 0.0
    %275 = vmatpush1.msra.mxu0 0.0
    %276 = vmatprep.subr.mxu0 0.0
    %277 = vmatpush1.msra.mxu0 0.0
    %278 = vmatprep.subr.mxu0 0.0
    %279 = vmatpush1.msra.mxu0 0.0
    %280 = vmatprep.subr.mxu0 0.0
    %281 = vmatpush1.msra.mxu0 0.0
    %282 = vmatprep.subr.mxu0 0.0
    %283 = vmatpush1.msra.mxu0 0.0
    %284 = vmatprep.subr.mxu0 0.0
    %285 = vmatpush1.msra.mxu0 0.0
    %286 = vmatprep.subr.mxu0 0.0
    %287 = vmatpush1.msra.mxu0 0.0
    %288 = vmatprep.subr.mxu0 0.0
    %289 = vmatpush1.msra.mxu0 0.0
    %290 = vmatprep.subr.mxu0 0.0
    %291 = vmatpush1.msra.mxu0 0.0
    %292 = vmatprep.subr.mxu0 0.0
    %293 = vmatpush1.msra.mxu0 0.0
    %294 = vmatprep.subr.mxu0 0.0
    %295 = vmatpush1.msra.mxu0 0.0
    %296 = vmatprep.subr.mxu0 0.0
    %297 = vmatpush1.msra.mxu0 0.0
    %298 = vmatprep.subr.mxu0 0.0
    %299 = vmatpush1.msra.mxu0 0.0
    %300 = vmatprep.subr.mxu0 0.0
    %301 = vmatpush1.msra.mxu0 0.0
    %302 = vmatprep.subr.mxu0 0.0
    %303 = vmatpush1.msra.mxu0 0.0
    %304 = vmatprep.subr.mxu0 0.0
    %305 = vmatpush1.msra.mxu0 0.0
    %306 = vmatprep.subr.mxu0 0.0
    %307 = vmatpush1.msra.mxu0 0.0
    %308 = vmatprep.subr.mxu0 0.0
    %309 = vmatpush1.msra.mxu0 0.0
    %310 = vmatprep.subr.mxu0 0.0
    %311 = vmatpush1.msra.mxu0 0.0
    %312 = vmatprep.subr.mxu0 0.0
    %313 = vmatpush1.msra.mxu0 0.0
    %314 = vmatprep.subr.mxu0 0.0
    %315 = vmatpush1.msra.mxu0 0.0
    %316 = vmatprep.subr.mxu0 0.0
    %317 = vmatpush1.msra.mxu0 0.0
    %318 = vmatprep.mubr.f32.mxu0 0.0
    %319 = vmatmul.mubr.f32.gmra.mrb[0].mxu0 %v252
    %v320 = vpop.f32.mrb[0].mxu0
    %v321 = vadd.f32 %v246, %v320
    %v322 = vpop.f32.mrb[0].mxu0
    %323 = vdwg.mxu0
    %v324 = vmul.f32 %v321, %v249
    %v325 = vadd.f32 %v140, %v324
    %v326 = vsel %vm150, %v325, 0.0
    %v327 = vsel %vm150, %v113, 0.0
    %v329 = vrot.slane %v327, 7
    %v331 = vsel %vm148, %v326, %v329
    %332 = vst [vmem:[#allocation2] sm:$0x3] %v331
    // Predicated region
    $region22: #{tpu_custom_call.1} parent=1 // pred_check
      _
    $region23: #{tpu_custom_call.1} parent=1 // pred_check_branch
      %334 = sbr.rel (0) target = $region25
    $region24: #{tpu_custom_call.1} parent=1 // pred_region
      %s336 = ssub.s32 32, 32
      %337 = vsyncadd [#allocation3], %s336
      %s339 = sshll.u32 [#allocation2], 4
      %s340 = int_to_ptr.vmem [resolvable:$true] %s339
      %342 = dma.vmem_to_hbm [thread:$0]  %s340, 32, %s5, [#allocation3]
    $region25: #{tpu_custom_call.1} parent=1 // pred_fallthru
      _
    // Predicated region
    $region26: #{tpu_custom_call.1} parent=1 // pred_check
      _
    $region27: #{tpu_custom_call.1} parent=1 // pred_check_branch
      %344 = sbr.rel (0) target = $region29
    $region28: #{tpu_custom_call.1} parent=1 // pred_region
      %345 = dma.done [#allocation3], 32
    $region29: #{tpu_custom_call.1} parent=1 // pred_fallthru
      _
    %346 = vsyncpa [#allocation3], 1

</llo_original>
